<compile_context>
chip_gen: v5e
topology: v5e:2x2
jax: 0.10.0
libtpu: 0.0.40
codegen_flags: <defaults>
</compile_context>

<pallas_src>
import jax
import jax.numpy as jnp
from jax import lax
from jax.experimental import pallas as pl
from jax.experimental.pallas import tpu as pltpu

INPUT_SIZE = 5
HIDDEN_SIZE = 20
NUM_CLASSES = 1
BN_EPS = 1e-5


def _ffnet_kernel(x_ref, w1_ref, w2_ref, w3_ref, w4t_ref, v_ref, out_ref):
    cdt = w1_ref.dtype                    # MXU operand dtype (bf16 or f32)
    v = v_ref[...]                        # [H, 7] f32: bn vectors + b4

    g1, be1 = v[:, 0:1], v[:, 1:2]
    g2, be2 = v[:, 2:3], v[:, 3:4]
    g3, be3 = v[:, 4:5], v[:, 5:6]
    b4 = v[0:1, 6:7]                      # [1, 1]
    w4t = w4t_ref[...]                    # [H, 1] f32 (elementwise use only)

    def bn_relu(h, g, be):
        # Training-mode BatchNorm1d over the batch (lane) axis + ReLU, one pass:
        # sum / sum-of-squares in f32, folded gamma*inv_std scale, fused shift.
        inv_n = 1.0 / h.shape[1]
        mean = jnp.sum(h, axis=1, keepdims=True) * inv_n          # [H, 1]
        ex2 = jnp.sum(h * h, axis=1, keepdims=True) * inv_n       # [H, 1]
        var = jnp.maximum(ex2 - mean * mean, 0.0)                 # clamp cancellation
        scale = g * lax.rsqrt(var + BN_EPS)                       # EUP rsqrt
        shift = be - mean * scale
        return jnp.maximum(h * scale + shift, 0.0)

    # Layer 1: [H, N] = W1 @ x^T, contracting the last dims of both operands
    # (no host-side transpose of x needed).  Biases b1..b3 dropped (cancelled
    # exactly by the BN mean subtraction).
    x = x_ref[...].astype(cdt)                                     # [N, I]
    h = lax.dot_general(w1_ref[...], x,
                        dimension_numbers=(((1,), (1,)), ((), ())),
                        preferred_element_type=jnp.float32)        # [H, N] f32
    h = bn_relu(h, g1, be1)
    h = jnp.dot(w2_ref[...], h.astype(cdt), preferred_element_type=jnp.float32)
    h = bn_relu(h, g2, be2)
    h = jnp.dot(w3_ref[...], h.astype(cdt), preferred_element_type=jnp.float32)
    h = bn_relu(h, g3, be3)
    # Final layer: y = W4 @ h + b4 as broadcast-mul + sublane reduce
    # (K=20, M=1 -> no MXU benefit).
    y = jnp.sum(w4t * h, axis=0, keepdims=True) + b4               # [1, N]
    out_ref[...] = y.astype(out_ref.dtype)


def pack_params(params, compute_dtype):
    """Weights as separate aligned inputs; BN vectors + b4 as one [H, 7] slab."""
    w1 = params["w1"].astype(compute_dtype)                        # [H, I]
    w2 = params["w2"].astype(compute_dtype)                        # [H, H]
    w3 = params["w3"].astype(compute_dtype)                        # [H, H]
    w4t = jnp.transpose(params["w4"]).astype(jnp.float32)          # [H, 1]
    b4col = jnp.zeros((HIDDEN_SIZE,), jnp.float32).at[0].set(params["b4"][0])
    vslab = jnp.stack(
        [params["g1"], params["be1"], params["g2"], params["be2"],
         params["g3"], params["be3"], b4col], axis=1
    ).astype(jnp.float32)                                          # [H, 7]
    return w1, w2, w3, w4t, vslab


def _vmem_limit_bytes():
    """Per-generation scoped-VMEM limit with headroom (112 MiB v5e/v6e, 48 MiB v7x)."""
    try:
        cap = int(pltpu.get_tpu_info().vmem_capacity_bytes)
    except Exception:
        cap = 0
    if cap <= 0:
        return 48 * 1024 * 1024  # conservative fallback, safe on all generations
    return min(112 * 1024 * 1024, max(32 * 1024 * 1024, cap - 16 * 1024 * 1024))


def ffnet_forward(x, params, compute_dtype=jnp.bfloat16):
    """x: [N, INPUT_SIZE] float32. Returns [N, NUM_CLASSES] float32.

    compute_dtype controls the MXU operand dtype (bf16 default; f32 for exact
    parity with the PyTorch reference).  Accumulation / BN stats are always f32.
    """
    n = x.shape[0]
    w1, w2, w3, w4t, vslab = pack_params(params, compute_dtype)
    vmem = pl.BlockSpec(memory_space=pltpu.MemorySpace.VMEM)

    param_bytes = sum(int(a.size) * a.dtype.itemsize for a in (w1, w2, w3, w4t, vslab))
    cost = pl.CostEstimate(
        flops=1840 * n,                                  # 2N*(5*20 + 20*20 + 20*20 + 20)
        transcendentals=3 * HIDDEN_SIZE,                 # one rsqrt per BN feature
        bytes_accessed=(INPUT_SIZE + NUM_CLASSES) * 4 * n + param_bytes,
    )

    out_t = pl.pallas_call(
        _ffnet_kernel,
        out_shape=jax.ShapeDtypeStruct((NUM_CLASSES, n), jnp.float32),
        in_specs=[vmem] * 6,
        out_specs=vmem,
        compiler_params=pltpu.CompilerParams(vmem_limit_bytes=_vmem_limit_bytes()),
        cost_estimate=cost,
    )(x.astype(jnp.float32), w1, w2, w3, w4t, vslab)
    return jnp.transpose(out_t)                          # [N, NUM_CLASSES] (layout-free)


def init_params(key):
    """Deterministic init mimicking PyTorch defaults, stored in PyTorch layout.

    nn.Linear: W [out, in], b [out] ~ U(-1/sqrt(fan_in), 1/sqrt(fan_in)).
    nn.BatchNorm1d: gamma = 1, beta = 0.
    """
    def linear_init(k, fan_in, fan_out):
        kw, kb = jax.random.split(k)
        bound = 1.0 / (float(fan_in) ** 0.5)
        w = jax.random.uniform(kw, (fan_out, fan_in), jnp.float32, -bound, bound)
        b = jax.random.uniform(kb, (fan_out,), jnp.float32, -bound, bound)
        return w, b

    k1, k2, k3, k4 = jax.random.split(key, 4)
    w1, b1 = linear_init(k1, INPUT_SIZE, HIDDEN_SIZE)
    w2, b2 = linear_init(k2, HIDDEN_SIZE, HIDDEN_SIZE)
    w3, b3 = linear_init(k3, HIDDEN_SIZE, HIDDEN_SIZE)
    w4, b4 = linear_init(k4, HIDDEN_SIZE, NUM_CLASSES)
    ones = jnp.ones((HIDDEN_SIZE,), jnp.float32)
    zeros = jnp.zeros((HIDDEN_SIZE,), jnp.float32)
    return {
        "w1": w1, "b1": b1, "g1": ones, "be1": zeros,
        "w2": w2, "b2": b2, "g2": ones, "be2": zeros,
        "w3": w3, "b3": b3, "g3": ones, "be3": zeros,
        "w4": w4, "b4": b4,
    }


def ffnet_reference(x, p):
    """Pure-JAX reference matching PyTorch semantics (training-mode BN, biases kept)."""
    def bn_relu(h, g, be):
        mean = jnp.mean(h, axis=0, keepdims=True)
        var = jnp.mean((h - mean) ** 2, axis=0, keepdims=True)
        return jnp.maximum((h - mean) / jnp.sqrt(var + BN_EPS) * g + be, 0.0)

    h = x @ p["w1"].T + p["b1"]
    h = bn_relu(h, p["g1"], p["be1"])
    h = h @ p["w2"].T + p["b2"]
    h = bn_relu(h, p["g2"], p["be2"])
    h = h @ p["w3"].T + p["b3"]
    h = bn_relu(h, p["g3"], p["be3"])
    return h @ p["w4"].T + p["b4"]


if __name__ == "__main__":
    key = jax.random.PRNGKey(0)
    kx, kp = jax.random.split(key)
    batch = 8
    x = jax.random.normal(kx, (batch, INPUT_SIZE), jnp.float32)
    params = init_params(kp)
    ref = ffnet_reference(x, params)

    # Exact path (f32 MXU operands): tight check against PyTorch-semantics reference.
    out_f32 = jax.block_until_ready(ffnet_forward(x, params, compute_dtype=jnp.float32))
    assert out_f32.shape == (batch, NUM_CLASSES), out_f32.shape
    assert jnp.allclose(out_f32, ref, atol=1e-4, rtol=1e-4), (out_f32, ref)

    # Default fast path (bf16 MXU operands, f32 accumulation/BN stats): looser
    # tolerance per the review's caveat (~1e-2 expected numeric drift).
    out_bf16 = jax.block_until_ready(ffnet_forward(x, params))
    assert out_bf16.shape == (batch, NUM_CLASSES), out_bf16.shape
    assert jnp.allclose(out_bf16, ref, atol=5e-2, rtol=5e-2), (out_bf16, ref)

    print("KERNEL_OK")
</pallas_src>

<mosaic_0001>
module attributes {stable_mosaic.version = 11 : i64} {
  func.func @_ffnet_kernel(%arg0: memref<8x5xf32, #tpu.memory_space<vmem>>, %arg1: memref<20x5xf32, #tpu.memory_space<vmem>>, %arg2: memref<20x20xf32, #tpu.memory_space<vmem>>, %arg3: memref<20x20xf32, #tpu.memory_space<vmem>>, %arg4: memref<20x1xf32, #tpu.memory_space<vmem>>, %arg5: memref<20x7xf32, #tpu.memory_space<vmem>>, %arg6: memref<1x8xf32, #tpu.memory_space<vmem>>) attributes {dimension_semantics = [], scalar_prefetch = 0 : i64, scratch_operands = 0 : i64, tpu.core_type = #tpu.core_type<tc>} {
    %c0 = arith.constant 0 : index
    %c0_0 = arith.constant 0 : index
    %0 = vector.load %arg5[%c0, %c0_0] : memref<20x7xf32, #tpu.memory_space<vmem>>, vector<20x7xf32>
    %1 = vector.extract_strided_slice %0 {offsets = [0, 0], sizes = [20, 1], strides = [1, 1]} : vector<20x7xf32> to vector<20x1xf32>
    %2 = vector.extract_strided_slice %0 {offsets = [0, 1], sizes = [20, 1], strides = [1, 1]} : vector<20x7xf32> to vector<20x1xf32>
    %3 = vector.extract_strided_slice %0 {offsets = [0, 2], sizes = [20, 1], strides = [1, 1]} : vector<20x7xf32> to vector<20x1xf32>
    %4 = vector.extract_strided_slice %0 {offsets = [0, 3], sizes = [20, 1], strides = [1, 1]} : vector<20x7xf32> to vector<20x1xf32>
    %5 = vector.extract_strided_slice %0 {offsets = [0, 4], sizes = [20, 1], strides = [1, 1]} : vector<20x7xf32> to vector<20x1xf32>
    %6 = vector.extract_strided_slice %0 {offsets = [0, 5], sizes = [20, 1], strides = [1, 1]} : vector<20x7xf32> to vector<20x1xf32>
    %7 = vector.extract_strided_slice %0 {offsets = [0, 6], sizes = [1, 1], strides = [1, 1]} : vector<20x7xf32> to vector<1x1xf32>
    %c0_1 = arith.constant 0 : index
    %c0_2 = arith.constant 0 : index
    %8 = vector.load %arg4[%c0_1, %c0_2] : memref<20x1xf32, #tpu.memory_space<vmem>>, vector<20x1xf32>
    %c0_3 = arith.constant 0 : index
    %c0_4 = arith.constant 0 : index
    %9 = vector.load %arg0[%c0_3, %c0_4] : memref<8x5xf32, #tpu.memory_space<vmem>>, vector<8x5xf32>
    %c0_5 = arith.constant 0 : index
    %c0_6 = arith.constant 0 : index
    %10 = vector.load %arg1[%c0_5, %c0_6] : memref<20x5xf32, #tpu.memory_space<vmem>>, vector<20x5xf32>
    %cst = arith.constant dense<0.000000e+00> : vector<20x8xf32>
    %11 = tpu.matmul %10, %9, %cst {dimension_numbers = #tpu.dot_dimension_numbers<[1], [1], [0], [0], [0, 0, 1, 0], [], []>} : vector<20x5xf32>, vector<8x5xf32>, vector<20x8xf32> -> vector<20x8xf32>
    %cst_7 = arith.constant dense<0.000000e+00> : vector<20xf32>
    %12 = vector.multi_reduction <add>, %11, %cst_7 [1] : vector<20x8xf32> to vector<20xf32>
    %13 = vector.shape_cast %12 : vector<20xf32> to vector<20x1xf32>
    %cst_8 = arith.constant 1.250000e-01 : f32
    %14 = vector.broadcast %cst_8 : f32 to vector<20x1xf32>
    %15 = arith.mulf %13, %14 : vector<20x1xf32>
    %16 = arith.mulf %11, %11 : vector<20x8xf32>
    %cst_9 = arith.constant dense<0.000000e+00> : vector<20xf32>
    %17 = vector.multi_reduction <add>, %16, %cst_9 [1] : vector<20x8xf32> to vector<20xf32>
    %18 = vector.shape_cast %17 : vector<20xf32> to vector<20x1xf32>
    %cst_10 = arith.constant 1.250000e-01 : f32
    %19 = vector.broadcast %cst_10 : f32 to vector<20x1xf32>
    %20 = arith.mulf %18, %19 : vector<20x1xf32>
    %21 = arith.mulf %15, %15 : vector<20x1xf32>
    %22 = arith.subf %20, %21 : vector<20x1xf32>
    %cst_11 = arith.constant 0.000000e+00 : f32
    %23 = vector.broadcast %cst_11 : f32 to vector<20x1xf32>
    %24 = arith.maximumf %22, %23 : vector<20x1xf32>
    %cst_12 = arith.constant 9.99999974E-6 : f32
    %25 = vector.broadcast %cst_12 : f32 to vector<20x1xf32>
    %26 = arith.addf %24, %25 : vector<20x1xf32>
    %27 = math.rsqrt %26 : vector<20x1xf32>
    %28 = arith.mulf %1, %27 : vector<20x1xf32>
    %29 = arith.mulf %15, %28 : vector<20x1xf32>
    %30 = arith.subf %2, %29 : vector<20x1xf32>
    %31 = vector.broadcast %28 : vector<20x1xf32> to vector<20x8xf32>
    %32 = arith.mulf %11, %31 : vector<20x8xf32>
    %33 = vector.broadcast %30 : vector<20x1xf32> to vector<20x8xf32>
    %34 = arith.addf %32, %33 : vector<20x8xf32>
    %cst_13 = arith.constant 0.000000e+00 : f32
    %35 = vector.broadcast %cst_13 : f32 to vector<20x8xf32>
    %36 = arith.maximumf %34, %35 : vector<20x8xf32>
    %c0_14 = arith.constant 0 : index
    %c0_15 = arith.constant 0 : index
    %37 = vector.load %arg2[%c0_14, %c0_15] : memref<20x20xf32, #tpu.memory_space<vmem>>, vector<20x20xf32>
    %cst_16 = arith.constant dense<0.000000e+00> : vector<20x8xf32>
    %38 = tpu.matmul %37, %36, %cst_16 {dimension_numbers = #tpu.dot_dimension_numbers<[1], [0], [0], [1], [0, 0, 1, 1], [], []>} : vector<20x20xf32>, vector<20x8xf32>, vector<20x8xf32> -> vector<20x8xf32>
    %cst_17 = arith.constant dense<0.000000e+00> : vector<20xf32>
    %39 = vector.multi_reduction <add>, %38, %cst_17 [1] : vector<20x8xf32> to vector<20xf32>
    %40 = vector.shape_cast %39 : vector<20xf32> to vector<20x1xf32>
    %cst_18 = arith.constant 1.250000e-01 : f32
    %41 = vector.broadcast %cst_18 : f32 to vector<20x1xf32>
    %42 = arith.mulf %40, %41 : vector<20x1xf32>
    %43 = arith.mulf %38, %38 : vector<20x8xf32>
    %cst_19 = arith.constant dense<0.000000e+00> : vector<20xf32>
    %44 = vector.multi_reduction <add>, %43, %cst_19 [1] : vector<20x8xf32> to vector<20xf32>
    %45 = vector.shape_cast %44 : vector<20xf32> to vector<20x1xf32>
    %cst_20 = arith.constant 1.250000e-01 : f32
    %46 = vector.broadcast %cst_20 : f32 to vector<20x1xf32>
    %47 = arith.mulf %45, %46 : vector<20x1xf32>
    %48 = arith.mulf %42, %42 : vector<20x1xf32>
    %49 = arith.subf %47, %48 : vector<20x1xf32>
    %cst_21 = arith.constant 0.000000e+00 : f32
    %50 = vector.broadcast %cst_21 : f32 to vector<20x1xf32>
    %51 = arith.maximumf %49, %50 : vector<20x1xf32>
    %cst_22 = arith.constant 9.99999974E-6 : f32
    %52 = vector.broadcast %cst_22 : f32 to vector<20x1xf32>
    %53 = arith.addf %51, %52 : vector<20x1xf32>
    %54 = math.rsqrt %53 : vector<20x1xf32>
    %55 = arith.mulf %3, %54 : vector<20x1xf32>
    %56 = arith.mulf %42, %55 : vector<20x1xf32>
    %57 = arith.subf %4, %56 : vector<20x1xf32>
    %58 = vector.broadcast %55 : vector<20x1xf32> to vector<20x8xf32>
    %59 = arith.mulf %38, %58 : vector<20x8xf32>
    %60 = vector.broadcast %57 : vector<20x1xf32> to vector<20x8xf32>
    %61 = arith.addf %59, %60 : vector<20x8xf32>
    %cst_23 = arith.constant 0.000000e+00 : f32
    %62 = vector.broadcast %cst_23 : f32 to vector<20x8xf32>
    %63 = arith.maximumf %61, %62 : vector<20x8xf32>
    %c0_24 = arith.constant 0 : index
    %c0_25 = arith.constant 0 : index
    %64 = vector.load %arg3[%c0_24, %c0_25] : memref<20x20xf32, #tpu.memory_space<vmem>>, vector<20x20xf32>
    %cst_26 = arith.constant dense<0.000000e+00> : vector<20x8xf32>
    %65 = tpu.matmul %64, %63, %cst_26 {dimension_numbers = #tpu.dot_dimension_numbers<[1], [0], [0], [1], [0, 0, 1, 1], [], []>} : vector<20x20xf32>, vector<20x8xf32>, vector<20x8xf32> -> vector<20x8xf32>
    %cst_27 = arith.constant dense<0.000000e+00> : vector<20xf32>
    %66 = vector.multi_reduction <add>, %65, %cst_27 [1] : vector<20x8xf32> to vector<20xf32>
    %67 = vector.shape_cast %66 : vector<20xf32> to vector<20x1xf32>
    %cst_28 = arith.constant 1.250000e-01 : f32
    %68 = vector.broadcast %cst_28 : f32 to vector<20x1xf32>
    %69 = arith.mulf %67, %68 : vector<20x1xf32>
    %70 = arith.mulf %65, %65 : vector<20x8xf32>
    %cst_29 = arith.constant dense<0.000000e+00> : vector<20xf32>
    %71 = vector.multi_reduction <add>, %70, %cst_29 [1] : vector<20x8xf32> to vector<20xf32>
    %72 = vector.shape_cast %71 : vector<20xf32> to vector<20x1xf32>
    %cst_30 = arith.constant 1.250000e-01 : f32
    %73 = vector.broadcast %cst_30 : f32 to vector<20x1xf32>
    %74 = arith.mulf %72, %73 : vector<20x1xf32>
    %75 = arith.mulf %69, %69 : vector<20x1xf32>
    %76 = arith.subf %74, %75 : vector<20x1xf32>
    %cst_31 = arith.constant 0.000000e+00 : f32
    %77 = vector.broadcast %cst_31 : f32 to vector<20x1xf32>
    %78 = arith.maximumf %76, %77 : vector<20x1xf32>
    %cst_32 = arith.constant 9.99999974E-6 : f32
    %79 = vector.broadcast %cst_32 : f32 to vector<20x1xf32>
    %80 = arith.addf %78, %79 : vector<20x1xf32>
    %81 = math.rsqrt %80 : vector<20x1xf32>
    %82 = arith.mulf %5, %81 : vector<20x1xf32>
    %83 = arith.mulf %69, %82 : vector<20x1xf32>
    %84 = arith.subf %6, %83 : vector<20x1xf32>
    %85 = vector.broadcast %82 : vector<20x1xf32> to vector<20x8xf32>
    %86 = arith.mulf %65, %85 : vector<20x8xf32>
    %87 = vector.broadcast %84 : vector<20x1xf32> to vector<20x8xf32>
    %88 = arith.addf %86, %87 : vector<20x8xf32>
    %cst_33 = arith.constant 0.000000e+00 : f32
    %89 = vector.broadcast %cst_33 : f32 to vector<20x8xf32>
    %90 = arith.maximumf %88, %89 : vector<20x8xf32>
    %91 = vector.broadcast %8 : vector<20x1xf32> to vector<20x8xf32>
    %92 = arith.mulf %91, %90 : vector<20x8xf32>
    %cst_34 = arith.constant dense<0.000000e+00> : vector<8xf32>
    %93 = vector.multi_reduction <add>, %92, %cst_34 [0] : vector<20x8xf32> to vector<8xf32>
    %94 = vector.shape_cast %93 : vector<8xf32> to vector<1x8xf32>
    %95 = vector.broadcast %7 : vector<1x1xf32> to vector<1x8xf32>
    %96 = arith.addf %94, %95 : vector<1x8xf32>
    %c0_35 = arith.constant 0 : index
    %c0_36 = arith.constant 0 : index
    %97 = vector.load %arg6[%c0_35, %c0_36] : memref<1x8xf32, #tpu.memory_space<vmem>>, vector<1x8xf32>
    tpu.vector_store %arg6[%c0_35, %c0_36], %96 {strides = array<i32>} : memref<1x8xf32, #tpu.memory_space<vmem>>, vector<1x8xf32>,
    return
  }
}

</mosaic_0001>

<llo_original>
// kernel: tpu_custom_call.1
$region0: #{tpu_custom_call.1}
  #allocation0 [shape = 'u32[]', space=smem, size = 0x4, offset = 0x4, fixed_abs, tag = 'smem constant byte address 0x4 - core index']
  #allocation1 [shape = 'u32[72,128]{1,0:T(1,128)}', space=vmem, size = 0x9000, scoped, tag = 'internal scratch']
  %s0 = inlined_call_operand.vmem [shape: f32[8,5], index: 0, kind: input, shape index: {}]
  %s1 = inlined_call_operand.vmem [shape: f32[20,5], index: 1, kind: input, shape index: {}]
  %s2 = inlined_call_operand.vmem [shape: f32[20,20], index: 2, kind: input, shape index: {}]
  %s3 = inlined_call_operand.vmem [shape: f32[20,20], index: 3, kind: input, shape index: {}]
  %s4 = inlined_call_operand.vmem [shape: f32[20,1], index: 4, kind: input, shape index: {}]
  %s5 = inlined_call_operand.vmem [shape: f32[20,7], index: 5, kind: input, shape index: {}]
  %s6 = inlined_call_operand.hbm [shape: f32[1,8], index: 6, kind: output, shape index: {}]
  %s7 = sld [smem:[#allocation0]]
  $region34: #{tpu_custom_call.1} parent=0
    _
  %s9 = ssub.s32 1, %s7
  %s10 = scalar_select 0, %s9, %s7
  $region1: #{tpu_custom_call.1} parent=0
    #allocation2 [shape = 'u8[512]{0}', space=vmem, size = 0x400, scoped, tag = 'output window, operand 0, single buffered']
    #allocation3 [shape = 's32[1]{0}', space=sflag, size = 0x4, scoped, tag = 'scoped memory for tpu_custom_call.1']
    %11 = vsyncpa [#allocation3], 0
    // Predicated region
    $region2: #{tpu_custom_call.1} parent=1 // pred_check
      _
    $region3: #{tpu_custom_call.1} parent=1 // pred_check_branch
      %13 = sbr.rel (0) target = $region5
    $region4: #{tpu_custom_call.1} parent=1 // pred_region
      _
    $region5: #{tpu_custom_call.1} parent=1 // pred_fallthru
      _
    // Predicated region
    $region6: #{tpu_custom_call.1} parent=1 // pred_check
      _
    $region7: #{tpu_custom_call.1} parent=1 // pred_check_branch
      %15 = sbr.rel (0) target = $region9
    $region8: #{tpu_custom_call.1} parent=1 // pred_region
      _
    $region9: #{tpu_custom_call.1} parent=1 // pred_fallthru
      _
    // Predicated region
    $region10: #{tpu_custom_call.1} parent=1 // pred_check
      _
    $region11: #{tpu_custom_call.1} parent=1 // pred_check_branch
      %17 = sbr.rel (0) target = $region13
    $region12: #{tpu_custom_call.1} parent=1 // pred_region
      _
    $region13: #{tpu_custom_call.1} parent=1 // pred_fallthru
      _
    // Predicated region
    $region14: #{tpu_custom_call.1} parent=1 // pred_check
      _
    $region15: #{tpu_custom_call.1} parent=1 // pred_check_branch
      %19 = sbr.rel (0) target = $region17
    $region16: #{tpu_custom_call.1} parent=1 // pred_region
      _
    $region17: #{tpu_custom_call.1} parent=1 // pred_fallthru
      _
    // Predicated region
    $region18: #{tpu_custom_call.1} parent=1 // pred_check
      _
    $region19: #{tpu_custom_call.1} parent=1 // pred_check_branch
      %21 = sbr.rel (0) target = $region21
    $region20: #{tpu_custom_call.1} parent=1 // pred_region
      _
    $region21: #{tpu_custom_call.1} parent=1 // pred_fallthru
      _
    // Predicated region
    $region22: #{tpu_custom_call.1} parent=1 // pred_check
      _
    $region23: #{tpu_custom_call.1} parent=1 // pred_check_branch
      %23 = sbr.rel (0) target = $region25
    $region24: #{tpu_custom_call.1} parent=1 // pred_region
      _
    $region25: #{tpu_custom_call.1} parent=1 // pred_fallthru
      _
    %v24 = vld [vmem:[%s5] sm:$0xff]
    %v25 = vld [vmem:[%s5 + $0x8] sm:$0xff]
    %v26 = vld [vmem:[%s5 + $0x10] sm:$0xf]
    %v27 = vld [vmem:[%s4] sm:$0xff]
    %v28 = vld [vmem:[%s4 + $0x8] sm:$0xff]
    %v29 = vld [vmem:[%s4 + $0x10] sm:$0xf]
    %v30 = vld [vmem:[%s0] sm:$0xff]
    %v31 = vld [vmem:[%s1] sm:$0xff]
    %v32 = vld [vmem:[%s1 + $0x8] sm:$0xff]
    %v33 = vld [vmem:[%s1 + $0x10] sm:$0xf]
    %vm34 = vcmask 39936
    %v36 = vsel %vm34, %v31, 0
    %v39 = vsel %vm34, %v32, 0
    %v42 = vsel %vm34, %v33, 0
    %v45 = vsel %vm34, %v30, 0
    %47 = vmatpush.xpose.msra.mxu0 0.0
    %48 = vmatpush.xpose.msra.mxu0 0.0
    %49 = vmatpush.xpose.msra.mxu0 0.0
    %50 = vmatpush.xpose.msra.mxu0 0.0
    %51 = vmatpush.xpose.msra.mxu0 0.0
    %52 = vmatpush.xpose.msra.mxu0 0.0
    %53 = vmatpush.xpose.msra.mxu0 0.0
    %54 = vmatpush.xpose.msra.mxu0 0.0
    %55 = vmatpush.xpose.msra.mxu0 0.0
    %56 = vmatpush.xpose.msra.mxu0 0.0
    %57 = vmatpush.xpose.msra.mxu0 0.0
    %58 = vmatpush.xpose.msra.mxu0 0.0
    %59 = vmatpush.xpose.msra.mxu0 0.0
    %60 = vmatpush.xpose.msra.mxu0 0.0
    %61 = vmatpush.xpose.msra.mxu0 0.0
    %62 = vmatpush.xpose.msra.mxu0 %v45
    %63 = vmatmul.f32.gmra.mxu0 %v36
    %v64 = vpop.f32.mrf.mxu0
    %v65 = vadd.f32 0.0, %v64
    %66 = vmatmul.f32.gmra.mxu0 %v39
    %v67 = vpop.f32.mrf.mxu0
    %v68 = vadd.f32 0.0, %v67
    %69 = vmatmul.f32.gmra.mxu0 %v42
    %v70 = vpop.f32.mrf.mxu0
    %v71 = vadd.f32 0.0, %v70
    %72 = vdwg.mxu0
    %vm73 = vcmask 64512
    %v74 = vsel %vm73, %v65, 0.0
    %75 = vadd.xlane.f32.xlu0 %v74
    %v76 = vpop.xlane.xlu0 %75
    %v77 = vsel %vm73, %v68, 0.0
    %78 = vadd.xlane.f32.xlu0 %v77
    %v79 = vpop.xlane.xlu0 %78
    %vm80 = vcmask 60416
    %v81 = vsel %vm80, %v71, 0.0
    %82 = vadd.xlane.f32.xlu0 %v81
    %v83 = vpop.xlane.xlu0 %82
    %v84 = vmul.f32 %v76, 0.125
    %v85 = vmul.f32 %v79, 0.125
    %v86 = vmul.f32 %v83, 0.125
    %v87 = vmul.f32 %v65, %v65
    %v88 = vmul.f32 %v68, %v68
    %v89 = vmul.f32 %v71, %v71
    %v90 = vsel %vm73, %v87, 0.0
    %91 = vadd.xlane.f32.xlu0 %v90
    %v92 = vpop.xlane.xlu0 %91
    %v93 = vsel %vm73, %v88, 0.0
    %94 = vadd.xlane.f32.xlu0 %v93
    %v95 = vpop.xlane.xlu0 %94
    %v96 = vsel %vm80, %v89, 0.0
    %97 = vadd.xlane.f32.xlu0 %v96
    %v98 = vpop.xlane.xlu0 %97
    %v99 = vmul.f32 %v92, 0.125
    %v100 = vmul.f32 %v95, 0.125
    %v101 = vmul.f32 %v98, 0.125
    %v102 = vmul.f32 %v84, %v84
    %v103 = vmul.f32 %v85, %v85
    %v104 = vmul.f32 %v86, %v86
    %v105 = vsub.f32 %v99, %v102
    %v106 = vsub.f32 %v100, %v103
    %v107 = vsub.f32 %v101, %v104
    %v108 = vmax.f32 %v105, 0.0
    %v109 = vmax.f32 %v106, 0.0
    %v110 = vmax.f32 %v107, 0.0
    %v111 = vadd.f32 %v108, 1e-05
    %v112 = vadd.f32 %v109, 1e-05
    %v113 = vadd.f32 %v110, 1e-05
    %v114 = vrsqrt.pop %v111
    %v115 = vmul.f32 %v114, %v111
    %v116 = vmul.f32 %v115, %v114
    %v117 = vmul.f32 0.5, %v116
    %v118 = vsub.f32 1.5, %v117
    %v119 = vmul.f32 %v114, %v118
    %vm120 = vweird.f32 %v111
    %vm121 = vweird.f32 %v114
    %vm122 = vmor %vm120, %vm121
    %v123 = vsel %vm122, %v114, %v119
    %v124 = vrsqrt.pop %v112
    %v125 = vmul.f32 %v124, %v112
    %v126 = vmul.f32 %v125, %v124
    %v127 = vmul.f32 0.5, %v126
    %v128 = vsub.f32 1.5, %v127
    %v129 = vmul.f32 %v124, %v128
    %vm130 = vweird.f32 %v112
    %vm131 = vweird.f32 %v124
    %vm132 = vmor %vm130, %vm131
    %v133 = vsel %vm132, %v124, %v129
    %v134 = vrsqrt.pop %v113
    %v135 = vmul.f32 %v134, %v113
    %v136 = vmul.f32 %v135, %v134
    %v137 = vmul.f32 0.5, %v136
    %v138 = vsub.f32 1.5, %v137
    %v139 = vmul.f32 %v134, %v138
    %vm140 = vweird.f32 %v113
    %vm141 = vweird.f32 %v134
    %vm142 = vmor %vm140, %vm141
    %v143 = vsel %vm142, %v134, %v139
    %v144 = vmul.f32 %v24, %v123
    %v145 = vmul.f32 %v25, %v133
    %v146 = vmul.f32 %v26, %v143
    %v147 = vmul.f32 %v84, %v144
    %v148 = vmul.f32 %v85, %v145
    %v149 = vmul.f32 %v86, %v146
    %153 = vrot.lane.b32.xlu0 %v147, 1
    %v154 = vpop.permute.xlu0 %153
    %155 = vrot.lane.b32.xlu0 %v148, 1
    %v156 = vpop.permute.xlu0 %155
    %157 = vrot.lane.b32.xlu0 %v149, 1
    %v158 = vpop.permute.xlu0 %157
    %v162 = vsub.f32 %v24, %v154
    %v163 = vsub.f32 %v25, %v156
    %v164 = vsub.f32 %v26, %v158
    %166 = vset.pattern.permute.xlu0 0
    %167 = vperm.xlu0 %166, %v144
    %v168 = vpop.permute.xlu0 %167
    %171 = vset.pattern.permute.xlu0 0
    %172 = vperm.xlu0 %171, %v145
    %v173 = vpop.permute.xlu0 %172
    %176 = vset.pattern.permute.xlu0 0
    %177 = vperm.xlu0 %176, %v146
    %v178 = vpop.permute.xlu0 %177
    %v180 = vmul.f32 %v65, %v168
    %v181 = vmul.f32 %v68, %v173
    %v182 = vmul.f32 %v71, %v178
    %184 = vset.pattern.permute.xlu0 1
    %185 = vperm.xlu0 %184, %v162
    %v186 = vpop.permute.xlu0 %185
    %189 = vset.pattern.permute.xlu0 1
    %190 = vperm.xlu0 %189, %v163
    %v191 = vpop.permute.xlu0 %190
    %194 = vset.pattern.permute.xlu0 1
    %195 = vperm.xlu0 %194, %v164
    %v196 = vpop.permute.xlu0 %195
    %v198 = vadd.f32 %v180, %v186
    %v199 = vadd.f32 %v181, %v191
    %v200 = vadd.f32 %v182, %v196
    %v201 = vmax.f32 %v198, 0.0
    %v202 = vmax.f32 %v199, 0.0
    %v203 = vmax.f32 %v200, 0.0
    %v204 = vld [vmem:[%s2] sm:$0xff]
    %v205 = vld [vmem:[%s2 + $0x8] sm:$0xff]
    %v206 = vld [vmem:[%s2 + $0x10] sm:$0xf]
    %vm207 = vcmask 162816
    %v209 = vsel %vm207, %v204, 0
    %v212 = vsel %vm207, %v205, 0
    %v215 = vsel %vm207, %v206, 0
    %vm217 = vcmask 1043456
    %v219 = vsel %vm217, %v203, 0
    %221 = vmatpush.msra.mxu0 0.0
    %222 = vmatpush.msra.mxu0 0.0
    %223 = vmatpush.msra.mxu0 0.0
    %224 = vmatpush.msra.mxu0 0.0
    %225 = vmatpush.msra.mxu0 0.0
    %226 = vmatpush.msra.mxu0 0.0
    %227 = vmatpush.msra.mxu0 0.0
    %228 = vmatpush.msra.mxu0 0.0
    %229 = vmatpush.msra.mxu0 0.0
    %230 = vmatpush.msra.mxu0 0.0
    %231 = vmatpush.msra.mxu0 0.0
    %232 = vmatpush.msra.mxu0 0.0
    %233 = vmatpush.msra.mxu0 0.0
    %234 = vmatpush.msra.mxu0 %v219
    %235 = vmatpush.msra.mxu0 %v202
    %236 = vmatpush.msra.mxu0 %v201
    %237 = vmatmul.f32.gmra.mxu0 %v209
    %v238 = vpop.f32.mrf.mxu0
    %v239 = vadd.f32 0.0, %v238
    %240 = vmatmul.f32.gmra.mxu0 %v212
    %v241 = vpop.f32.mrf.mxu0
    %v242 = vadd.f32 0.0, %v241
    %243 = vmatmul.f32.gmra.mxu0 %v215
    %v244 = vpop.f32.mrf.mxu0
    %v245 = vadd.f32 0.0, %v244
    %246 = vdwg.mxu0
    %v247 = vsel %vm73, %v239, 0.0
    %248 = vadd.xlane.f32.xlu0 %v247
    %v249 = vpop.xlane.xlu0 %248
    %v250 = vsel %vm73, %v242, 0.0
    %251 = vadd.xlane.f32.xlu0 %v250
    %v252 = vpop.xlane.xlu0 %251
    %v253 = vsel %vm80, %v245, 0.0
    %254 = vadd.xlane.f32.xlu0 %v253
    %v255 = vpop.xlane.xlu0 %254
    %v256 = vmul.f32 %v249, 0.125
    %v257 = vmul.f32 %v252, 0.125
    %v258 = vmul.f32 %v255, 0.125
    %v259 = vmul.f32 %v239, %v239
    %v260 = vmul.f32 %v242, %v242
    %v261 = vmul.f32 %v245, %v245
    %v262 = vsel %vm73, %v259, 0.0
    %263 = vadd.xlane.f32.xlu0 %v262
    %v264 = vpop.xlane.xlu0 %263
    %v265 = vsel %vm73, %v260, 0.0
    %266 = vadd.xlane.f32.xlu0 %v265
    %v267 = vpop.xlane.xlu0 %266
    %v268 = vsel %vm80, %v261, 0.0
    %269 = vadd.xlane.f32.xlu0 %v268
    %v270 = vpop.xlane.xlu0 %269
    %v271 = vmul.f32 %v264, 0.125
    %v272 = vmul.f32 %v267, 0.125
    %v273 = vmul.f32 %v270, 0.125
    %v274 = vmul.f32 %v256, %v256
    %v275 = vmul.f32 %v257, %v257
    %v276 = vmul.f32 %v258, %v258
    %v277 = vsub.f32 %v271, %v274
    %v278 = vsub.f32 %v272, %v275
    %v279 = vsub.f32 %v273, %v276
    %v280 = vmax.f32 %v277, 0.0
    %v281 = vmax.f32 %v278, 0.0
    %v282 = vmax.f32 %v279, 0.0
    %v283 = vadd.f32 %v280, 1e-05
    %v284 = vadd.f32 %v281, 1e-05
    %v285 = vadd.f32 %v282, 1e-05
    %v286 = vrsqrt.pop %v283
    %v287 = vmul.f32 %v286, %v283
    %v288 = vmul.f32 %v287, %v286
    %v289 = vmul.f32 0.5, %v288
    %v290 = vsub.f32 1.5, %v289
    %v291 = vmul.f32 %v286, %v290
    %vm292 = vweird.f32 %v283
    %vm293 = vweird.f32 %v286
    %vm294 = vmor %vm292, %vm293
    %v295 = vsel %vm294, %v286, %v291
    %v296 = vrsqrt.pop %v284
    %v297 = vmul.f32 %v296, %v284
    %v298 = vmul.f32 %v297, %v296
    %v299 = vmul.f32 0.5, %v298
    %v300 = vsub.f32 1.5, %v299
    %v301 = vmul.f32 %v296, %v300
    %vm302 = vweird.f32 %v284
    %vm303 = vweird.f32 %v296
    %vm304 = vmor %vm302, %vm303
    %v305 = vsel %vm304, %v296, %v301
    %v306 = vrsqrt.pop %v285
    %v307 = vmul.f32 %v306, %v285
    %v308 = vmul.f32 %v307, %v306
    %v309 = vmul.f32 0.5, %v308
    %v310 = vsub.f32 1.5, %v309
    %v311 = vmul.f32 %v306, %v310
    %vm312 = vweird.f32 %v285
    %vm313 = vweird.f32 %v306
    %vm314 = vmor %vm312, %vm313
    %v315 = vsel %vm314, %v306, %v311
    %v316 = vmul.f32 %v24, %v295
    %v317 = vmul.f32 %v25, %v305
    %v318 = vmul.f32 %v26, %v315
    %v319 = vmul.f32 %v256, %v316
    %v320 = vmul.f32 %v257, %v317
    %v321 = vmul.f32 %v258, %v318
    %325 = vrot.lane.b32.xlu0 %v319, 1
    %v326 = vpop.permute.xlu0 %325
    %327 = vrot.lane.b32.xlu0 %v320, 1
    %v328 = vpop.permute.xlu0 %327
    %329 = vrot.lane.b32.xlu0 %v321, 1
    %v330 = vpop.permute.xlu0 %329
    %v334 = vsub.f32 %v24, %v326
    %v335 = vsub.f32 %v25, %v328
    %v336 = vsub.f32 %v26, %v330
    %338 = vset.pattern.permute.xlu0 2
    %339 = vperm.xlu0 %338, %v316
    %v340 = vpop.permute.xlu0 %339
    %343 = vset.pattern.permute.xlu0 2
    %344 = vperm.xlu0 %343, %v317
    %v345 = vpop.permute.xlu0 %344
    %348 = vset.pattern.permute.xlu0 2
    %349 = vperm.xlu0 %348, %v318
    %v350 = vpop.permute.xlu0 %349
    %v352 = vmul.f32 %v239, %v340
    %v353 = vmul.f32 %v242, %v345
    %v354 = vmul.f32 %v245, %v350
    %356 = vset.pattern.permute.xlu0 3
    %357 = vperm.xlu0 %356, %v334
    %v358 = vpop.permute.xlu0 %357
    %361 = vset.pattern.permute.xlu0 3
    %362 = vperm.xlu0 %361, %v335
    %v363 = vpop.permute.xlu0 %362
    %366 = vset.pattern.permute.xlu0 3
    %367 = vperm.xlu0 %366, %v336
    %v368 = vpop.permute.xlu0 %367
    %v370 = vadd.f32 %v352, %v358
    %v371 = vadd.f32 %v353, %v363
    %v372 = vadd.f32 %v354, %v368
    %v373 = vmax.f32 %v370, 0.0
    %v374 = vmax.f32 %v371, 0.0
    %v375 = vmax.f32 %v372, 0.0
    %v376 = vld [vmem:[%s3] sm:$0xff]
    %v377 = vld [vmem:[%s3 + $0x8] sm:$0xff]
    %v378 = vld [vmem:[%s3 + $0x10] sm:$0xf]
    %v380 = vsel %vm207, %v376, 0
    %v383 = vsel %vm207, %v377, 0
    %v386 = vsel %vm207, %v378, 0
    %v389 = vsel %vm217, %v375, 0
    %391 = vmatpush.msra.mxu0 0.0
    %392 = vmatpush.msra.mxu0 0.0
    %393 = vmatpush.msra.mxu0 0.0
    %394 = vmatpush.msra.mxu0 0.0
    %395 = vmatpush.msra.mxu0 0.0
    %396 = vmatpush.msra.mxu0 0.0
    %397 = vmatpush.msra.mxu0 0.0
    %398 = vmatpush.msra.mxu0 0.0
    %399 = vmatpush.msra.mxu0 0.0
    %400 = vmatpush.msra.mxu0 0.0
    %401 = vmatpush.msra.mxu0 0.0
    %402 = vmatpush.msra.mxu0 0.0
    %403 = vmatpush.msra.mxu0 0.0
    %404 = vmatpush.msra.mxu0 %v389
    %405 = vmatpush.msra.mxu0 %v374
    %406 = vmatpush.msra.mxu0 %v373
    %407 = vmatmul.f32.gmra.mxu0 %v380
    %v408 = vpop.f32.mrf.mxu0
    %v409 = vadd.f32 0.0, %v408
    %410 = vmatmul.f32.gmra.mxu0 %v383
    %v411 = vpop.f32.mrf.mxu0
    %v412 = vadd.f32 0.0, %v411
    %413 = vmatmul.f32.gmra.mxu0 %v386
    %v414 = vpop.f32.mrf.mxu0
    %v415 = vadd.f32 0.0, %v414
    %416 = vdwg.mxu0
    %v417 = vsel %vm73, %v409, 0.0
    %418 = vadd.xlane.f32.xlu0 %v417
    %v419 = vpop.xlane.xlu0 %418
    %v420 = vsel %vm73, %v412, 0.0
    %421 = vadd.xlane.f32.xlu0 %v420
    %v422 = vpop.xlane.xlu0 %421
    %v423 = vsel %vm80, %v415, 0.0
    %424 = vadd.xlane.f32.xlu0 %v423
    %v425 = vpop.xlane.xlu0 %424
    %v426 = vmul.f32 %v419, 0.125
    %v427 = vmul.f32 %v422, 0.125
    %v428 = vmul.f32 %v425, 0.125
    %v429 = vmul.f32 %v409, %v409
    %v430 = vmul.f32 %v412, %v412
    %v431 = vmul.f32 %v415, %v415
    %v432 = vsel %vm73, %v429, 0.0
    %433 = vadd.xlane.f32.xlu0 %v432
    %v434 = vpop.xlane.xlu0 %433
    %v435 = vsel %vm73, %v430, 0.0
    %436 = vadd.xlane.f32.xlu0 %v435
    %v437 = vpop.xlane.xlu0 %436
    %v438 = vsel %vm80, %v431, 0.0
    %439 = vadd.xlane.f32.xlu0 %v438
    %v440 = vpop.xlane.xlu0 %439
    %v441 = vmul.f32 %v434, 0.125
    %v442 = vmul.f32 %v437, 0.125
    %v443 = vmul.f32 %v440, 0.125
    %v444 = vmul.f32 %v426, %v426
    %v445 = vmul.f32 %v427, %v427
    %v446 = vmul.f32 %v428, %v428
    %v447 = vsub.f32 %v441, %v444
    %v448 = vsub.f32 %v442, %v445
    %v449 = vsub.f32 %v443, %v446
    %v450 = vmax.f32 %v447, 0.0
    %v451 = vmax.f32 %v448, 0.0
    %v452 = vmax.f32 %v449, 0.0
    %v453 = vadd.f32 %v450, 1e-05
    %v454 = vadd.f32 %v451, 1e-05
    %v455 = vadd.f32 %v452, 1e-05
    %v456 = vrsqrt.pop %v453
    %v457 = vmul.f32 %v456, %v453
    %v458 = vmul.f32 %v457, %v456
    %v459 = vmul.f32 0.5, %v458
    %v460 = vsub.f32 1.5, %v459
    %v461 = vmul.f32 %v456, %v460
    %vm462 = vweird.f32 %v453
    %vm463 = vweird.f32 %v456
    %vm464 = vmor %vm462, %vm463
    %v465 = vsel %vm464, %v456, %v461
    %v466 = vrsqrt.pop %v454
    %v467 = vmul.f32 %v466, %v454
    %v468 = vmul.f32 %v467, %v466
    %v469 = vmul.f32 0.5, %v468
    %v470 = vsub.f32 1.5, %v469
    %v471 = vmul.f32 %v466, %v470
    %vm472 = vweird.f32 %v454
    %vm473 = vweird.f32 %v466
    %vm474 = vmor %vm472, %vm473
    %v475 = vsel %vm474, %v466, %v471
    %v476 = vrsqrt.pop %v455
    %v477 = vmul.f32 %v476, %v455
    %v478 = vmul.f32 %v477, %v476
    %v479 = vmul.f32 0.5, %v478
    %v480 = vsub.f32 1.5, %v479
    %v481 = vmul.f32 %v476, %v480
    %vm482 = vweird.f32 %v455
    %vm483 = vweird.f32 %v476
    %vm484 = vmor %vm482, %vm483
    %v485 = vsel %vm484, %v476, %v481
    %v486 = vmul.f32 %v24, %v465
    %v487 = vmul.f32 %v25, %v475
    %v488 = vmul.f32 %v26, %v485
    %v489 = vmul.f32 %v426, %v486
    %v490 = vmul.f32 %v427, %v487
    %v491 = vmul.f32 %v428, %v488
    %495 = vrot.lane.b32.xlu0 %v489, 1
    %v496 = vpop.permute.xlu0 %495
    %497 = vrot.lane.b32.xlu0 %v490, 1
    %v498 = vpop.permute.xlu0 %497
    %499 = vrot.lane.b32.xlu0 %v491, 1
    %v500 = vpop.permute.xlu0 %499
    %v504 = vsub.f32 %v24, %v496
    %v505 = vsub.f32 %v25, %v498
    %v506 = vsub.f32 %v26, %v500
    %508 = vset.pattern.permute.xlu0 4
    %509 = vperm.xlu0 %508, %v486
    %v510 = vpop.permute.xlu0 %509
    %513 = vset.pattern.permute.xlu0 4
    %514 = vperm.xlu0 %513, %v487
    %v515 = vpop.permute.xlu0 %514
    %518 = vset.pattern.permute.xlu0 4
    %519 = vperm.xlu0 %518, %v488
    %v520 = vpop.permute.xlu0 %519
    %v522 = vmul.f32 %v409, %v510
    %v523 = vmul.f32 %v412, %v515
    %v524 = vmul.f32 %v415, %v520
    %526 = vset.pattern.permute.xlu0 5
    %527 = vperm.xlu0 %526, %v504
    %v528 = vpop.permute.xlu0 %527
    %531 = vset.pattern.permute.xlu0 5
    %532 = vperm.xlu0 %531, %v505
    %v533 = vpop.permute.xlu0 %532
    %536 = vset.pattern.permute.xlu0 5
    %537 = vperm.xlu0 %536, %v506
    %v538 = vpop.permute.xlu0 %537
    %v540 = vadd.f32 %v522, %v528
    %v541 = vadd.f32 %v523, %v533
    %v542 = vadd.f32 %v524, %v538
    %v543 = vmax.f32 %v540, 0.0
    %v544 = vmax.f32 %v541, 0.0
    %v545 = vmax.f32 %v542, 0.0
    %547 = vset.pattern.permute.xlu0 0
    %548 = vperm.xlu0 %547, %v27
    %v549 = vpop.permute.xlu0 %548
    %552 = vset.pattern.permute.xlu0 0
    %553 = vperm.xlu0 %552, %v28
    %v554 = vpop.permute.xlu0 %553
    %557 = vset.pattern.permute.xlu0 0
    %558 = vperm.xlu0 %557, %v29
    %v559 = vpop.permute.xlu0 %558
    %v561 = vmul.f32 %v549, %v543
    %v562 = vmul.f32 %v554, %v544
    %v563 = vmul.f32 %v559, %v545
    %v564 = vsel %vm73, %v561, 0.0
    %v565 = vsel %vm73, %v562, 0.0
    %v566 = vadd.f32 %v564, %v565
    %v567 = vsel %vm80, %v563, 0.0
    %v568 = vadd.f32 %v566, %v567
    %v569 = vrot.slane %v568, 4
    %v570 = vadd.f32 %v568, %v569
    %v571 = vrot.slane %v570, 2
    %v572 = vadd.f32 %v570, %v571
    %v573 = vrot.slane %v572, 1
    %v574 = vadd.f32 %v572, %v573
    %576 = vset.pattern.permute.xlu0 6
    %577 = vperm.xlu0 %576, %v24
    %v578 = vpop.permute.xlu0 %577
    %v580 = vadd.f32 %v574, %v578
    %vm581 = vcmask 57344
    %582 = vst.msk [vmem:[#allocation2] sm:$0x1] %vm581, %v580
    // Predicated region
    $region26: #{tpu_custom_call.1} parent=1 // pred_check
      _
    $region27: #{tpu_custom_call.1} parent=1 // pred_check_branch
      %584 = sbr.rel (0) target = $region29
    $region28: #{tpu_custom_call.1} parent=1 // pred_region
      %586 = vsyncadd [#allocation3], 0
      %s588 = sshll.u32 [#allocation2], 4
      %s589 = int_to_ptr.vmem [resolvable:$true] %s588
      %s590 = sshll.u32 %s6, 4
      %s591 = int_to_ptr.hbm [resolvable:$true] %s590
      %593 = dma.vmem_to_hbm [thread:$0]  %s589, 16, %s591, [#allocation3]
    $region29: #{tpu_custom_call.1} parent=1 // pred_fallthru
      _
    // Predicated region
    $region30: #{tpu_custom_call.1} parent=1 // pred_check
      _
    $region31: #{tpu_custom_call.1} parent=1 // pred_check_branch
      %595 = sbr.rel (0) target = $region33
    $region32: #{tpu_custom_call.1} parent=1 // pred_region
      %597 = dma.done [#allocation3], 16
    $region33: #{tpu_custom_call.1} parent=1 // pred_fallthru
      _
    %598 = vsyncpa [#allocation3], 1

</llo_original>
